<compile_context>
chip_gen: v7x
topology: tpu7x:2x2x1
jax: 0.10.0
libtpu: 0.0.40
codegen_flags: <defaults>
</compile_context>

<pallas_src>
import jax
import jax.numpy as jnp
from jax.experimental import pallas as pl
from jax.experimental.pallas import tpu as pltpu

_LANE = 128
_SUB = 8
_TILE_BUDGET = 16 * 1024 * 1024        # double-buffered x+out tiles per step
_TARGET_STEP_BYTES = 1 * 1024 * 1024   # aim for >= ~1 MiB of traffic per step
_VMEM_LIMIT = 48 * 1024 * 1024         # < v7x 64 MiB physical; fine on v5e/v6e


# ---------------------------------------------------------------------------
# Path A: tiny channel counts -> VPU, sublane-dense tiles, SMEM scalar params.
# ---------------------------------------------------------------------------
def _outconv_vpu_kernel(x_ref, w_ref, b_ref, o_ref):
    """x_ref: (BN, C_in, TS, 128) VMEM   w_ref: (C_out*C_in,) SMEM
       b_ref: (C_out,) SMEM              o_ref: (BN, C_out, TS, 128) VMEM"""
    c_in = x_ref.shape[1]
    c_out = o_ref.shape[1]
    x = x_ref[...].astype(jnp.float32)              # dense (BN, C_in, TS, 128)
    outs = []
    for o in range(c_out):
        acc = x[:, 0] * w_ref[o * c_in]             # SMEM scalar * dense slab
        for ci in range(1, c_in):
            acc = acc + x[:, ci] * w_ref[o * c_in + ci]
        outs.append(acc + b_ref[o])
    # Single lane-dense store of the whole (BN, C_out, TS, 128) tile.
    o_ref[...] = jnp.stack(outs, axis=1).astype(o_ref.dtype)


def _outconv_small(x_nchw, w_mat, bias):
    N, C_in, H, W = x_nchw.shape
    C_out = w_mat.shape[0]
    HW = H * W
    dtype = x_nchw.dtype
    itemsize = jnp.dtype(dtype).itemsize

    # NCHW -> (N, C_in, HW); spatial gets repacked into (S, 128) slabs.
    x3 = x_nchw.reshape(N, C_in, HW)
    s0 = pl.cdiv(HW, _LANE)

    row_bytes = (C_in + C_out) * _LANE * itemsize   # x+out, per image, per sublane row
    img_bytes = s0 * row_bytes

    # Batch several images per grid step when a single image is tiny, but keep
    # >= 2 grid steps (when N allows) so both v7x TensorCores get work.
    if img_bytes >= _TARGET_STEP_BYTES or N == 1:
        bn = 1
    else:
        want = max(1, _TARGET_STEP_BYTES // img_bytes)
        want = min(want, max(1, N // 2))
        bn = 1
        for d in range(1, N + 1):
            if N % d == 0 and d <= want:
                bn = d

    # Sublane-tile the spatial axis within the double-buffered VMEM budget.
    ts_cap = max(1, _TILE_BUDGET // (2 * bn * row_bytes))
    if s0 <= ts_cap:
        ts, s_pad = s0, s0
    else:
        ts = max(_SUB, (ts_cap // _SUB) * _SUB)
        s_pad = pl.cdiv(s0, ts) * ts

    hw_pad = s_pad * _LANE
    if hw_pad != HW:
        x3 = jnp.pad(x3, ((0, 0), (0, 0), (0, hw_pad - HW)))
    x4 = x3.reshape(N, C_in, s_pad, _LANE)

    w_flat = w_mat.reshape(-1).astype(jnp.float32)     # (C_out*C_in,) -> SMEM
    b_vec = bias.reshape(-1).astype(jnp.float32)       # (C_out,)      -> SMEM

    grid = (N // bn, s_pad // ts)

    cost = pl.CostEstimate(
        flops=2 * N * HW * C_in * C_out,
        transcendentals=0,
        bytes_accessed=itemsize * N * hw_pad * (C_in + C_out)
        + 4 * (C_in * C_out + C_out),
    )

    y4 = pl.pallas_call(
        _outconv_vpu_kernel,
        out_shape=jax.ShapeDtypeStruct((N, C_out, s_pad, _LANE), dtype),
        grid_spec=pltpu.PrefetchScalarGridSpec(
            num_scalar_prefetch=0,
            grid=grid,
            in_specs=[
                pl.BlockSpec((bn, C_in, ts, _LANE), lambda n, s: (n, 0, s, 0)),
                pl.BlockSpec(memory_space=pltpu.MemorySpace.SMEM),
                pl.BlockSpec(memory_space=pltpu.MemorySpace.SMEM),
            ],
            out_specs=pl.BlockSpec((bn, C_out, ts, _LANE),
                                   lambda n, s: (n, 0, s, 0)),
        ),
        compiler_params=pltpu.CompilerParams(
            dimension_semantics=("parallel", "parallel"),
            vmem_limit_bytes=_VMEM_LIMIT),
        cost_estimate=cost,
    )(x4, w_flat, b_vec)

    y3 = y4.reshape(N, C_out, hw_pad)
    if hw_pad != HW:
        y3 = y3[:, :, :HW]
    return y3.reshape(N, C_out, H, W)


# ---------------------------------------------------------------------------
# Path B: larger channel counts -> MXU matmul on lane-dense spatial tiles.
# ---------------------------------------------------------------------------
def _outconv_mxu_kernel(x_ref, w_ref, b_ref, o_ref):
    """x_ref: (C_in, TL)  w_ref: (C_out, C_in)  b_ref: (C_out, 1)  o_ref: (C_out, TL)"""
    acc = jnp.dot(w_ref[...], x_ref[...], preferred_element_type=jnp.float32)
    o_ref[...] = (acc + b_ref[...]).astype(o_ref.dtype)


def _outconv_mxu(x_nchw, w_mat, bias):
    N, C_in, H, W = x_nchw.shape
    C_out = w_mat.shape[0]
    HW = H * W
    dtype = x_nchw.dtype
    itemsize = jnp.dtype(dtype).itemsize

    x3 = x_nchw.reshape(N, C_in, HW)

    # Bounded lane tile (never "full HW"): guarantees fit on v7x VMEM and keeps
    # double-buffering alive for big images; pad spatial up to a tile multiple.
    per_lane = 2 * (C_in + C_out) * itemsize
    tl_cap = max(_LANE, (_TILE_BUDGET // per_lane) // _LANE * _LANE)
    hw_128 = pl.cdiv(HW, _LANE) * _LANE
    tl = min(hw_128, tl_cap)
    hw_pad = pl.cdiv(HW, tl) * tl
    if hw_pad != HW:
        x3 = jnp.pad(x3, ((0, 0), (0, 0), (0, hw_pad - HW)))

    # Keep both MXU operands in the activation dtype; accumulate in f32.
    w_cast = w_mat.astype(dtype)
    b_col = bias.reshape(C_out, 1).astype(jnp.float32)

    grid = (N, hw_pad // tl)

    cost = pl.CostEstimate(
        flops=2 * N * HW * C_in * C_out,
        transcendentals=0,
        bytes_accessed=itemsize * N * hw_pad * (C_in + C_out)
        + itemsize * C_in * C_out + 4 * C_out,
    )

    y3 = pl.pallas_call(
        _outconv_mxu_kernel,
        out_shape=jax.ShapeDtypeStruct((N, C_out, hw_pad), dtype),
        grid_spec=pltpu.PrefetchScalarGridSpec(
            num_scalar_prefetch=0,
            grid=grid,
            in_specs=[
                pl.BlockSpec((None, C_in, tl), lambda n, l: (n, 0, l)),
                pl.BlockSpec((C_out, C_in), lambda n, l: (0, 0)),
                pl.BlockSpec((C_out, 1), lambda n, l: (0, 0)),
            ],
            out_specs=pl.BlockSpec((None, C_out, tl), lambda n, l: (n, 0, l)),
        ),
        compiler_params=pltpu.CompilerParams(
            dimension_semantics=("parallel", "parallel"),
            vmem_limit_bytes=_VMEM_LIMIT),
        cost_estimate=cost,
    )(x3, w_cast, b_col)

    if hw_pad != HW:
        y3 = y3[:, :, :HW]
    return y3.reshape(N, C_out, H, W)


def outconv_pallas(x_nchw, weight, bias):
    """1x1 Conv2d (OutConv) on native NCHW via Pallas.

    x_nchw: (N, C_in, H, W); weight: (C_out, C_in, 1, 1); bias: (C_out,).
    Returns (N, C_out, H, W).
    """
    C_out, C_in = weight.shape[0], weight.shape[1]
    w_mat = weight.reshape(C_out, C_in)
    if C_in <= 16 and C_out <= 16:
        return _outconv_small(x_nchw, w_mat, bias)
    return _outconv_mxu(x_nchw, w_mat, bias)


if __name__ == "__main__":
    key = jax.random.PRNGKey(0)
    k_x, k_w, k_b, k_x2, k_w2, k_b2 = jax.random.split(key, 6)

    # --- OutConv case: 4 -> 3 channels (VPU / sublane-dense path) ---
    N, C_in, C_out, H, W = 2, 4, 3, 16, 16
    x = jax.random.normal(k_x, (N, C_in, H, W), dtype=jnp.float32)
    # PyTorch Conv2d default init: uniform(+-1/sqrt(fan_in)), fan_in = C_in*1*1
    bound = 1.0 / jnp.sqrt(jnp.float32(C_in))
    weight = jax.random.uniform(k_w, (C_out, C_in, 1, 1),
                                minval=-bound, maxval=bound, dtype=jnp.float32)
    bias = jax.random.uniform(k_b, (C_out,),
                              minval=-bound, maxval=bound, dtype=jnp.float32)

    y = jax.block_until_ready(outconv_pallas(x, weight, bias))
    ref = jnp.einsum("nchw,oc->nohw", x, weight.reshape(C_out, C_in)) \
        + bias.reshape(1, C_out, 1, 1)
    assert y.shape == (N, C_out, H, W)
    assert jnp.allclose(y, ref, atol=1e-5, rtol=1e-5)

    # --- Larger-channel sanity check (MXU fallback path) ---
    N2, C_in2, C_out2 = 2, 32, 20
    x2 = jax.random.normal(k_x2, (N2, C_in2, H, W), dtype=jnp.float32)
    bound2 = 1.0 / jnp.sqrt(jnp.float32(C_in2))
    weight2 = jax.random.uniform(k_w2, (C_out2, C_in2, 1, 1),
                                 minval=-bound2, maxval=bound2, dtype=jnp.float32)
    bias2 = jax.random.uniform(k_b2, (C_out2,),
                               minval=-bound2, maxval=bound2, dtype=jnp.float32)
    y2 = jax.block_until_ready(outconv_pallas(x2, weight2, bias2))
    ref2 = jnp.einsum("nchw,oc->nohw", x2, weight2.reshape(C_out2, C_in2)) \
        + bias2.reshape(1, C_out2, 1, 1)
    assert y2.shape == (N2, C_out2, H, W)
    # Loose tolerance: MXU default-precision matmul vs XLA einsum.
    assert jnp.allclose(y2, ref2, atol=2e-2, rtol=2e-2)

    print("KERNEL_OK")
</pallas_src>

<mosaic_0001>
module attributes {stable_mosaic.version = 11 : i64} {
  func.func @_outconv_vpu_kernel(%arg0: i32, %arg1: i32, %arg2: memref<1x4x2x128xf32, #tpu.memory_space<vmem>>, %arg3: memref<12xf32, #tpu.memory_space<smem>>, %arg4: memref<3xf32, #tpu.memory_space<smem>>, %arg5: memref<1x3x2x128xf32, #tpu.memory_space<vmem>>) attributes {dimension_semantics = [#tpu.dimension_semantics<parallel>, #tpu.dimension_semantics<parallel>], iteration_bounds = array<i64: 2, 1>, scalar_prefetch = 0 : i64, scratch_operands = 0 : i64, tpu.core_type = #tpu.core_type<tc>, window_params = [{transform_indices = @transform_0, window_bounds = array<i64: 1, 4, 2, 128>}, {transform_indices = @transform_1, window_bounds = array<i64: 12>}, {transform_indices = @transform_2, window_bounds = array<i64: 3>}, {transform_indices = @transform_3, window_bounds = array<i64: 1, 3, 2, 128>}]} {
    %c0 = arith.constant 0 : index
    %c0_0 = arith.constant 0 : index
    %c0_1 = arith.constant 0 : index
    %c0_2 = arith.constant 0 : index
    %0 = vector.load %arg2[%c0, %c0_0, %c0_1, %c0_2] : memref<1x4x2x128xf32, #tpu.memory_space<vmem>>, vector<1x4x2x128xf32>
    %1 = vector.extract_strided_slice %0 {offsets = [0, 0, 0, 0], sizes = [1, 1, 2, 128], strides = [1, 1, 1, 1]} : vector<1x4x2x128xf32> to vector<1x1x2x128xf32>
    %2 = vector.shape_cast %1 : vector<1x1x2x128xf32> to vector<1x2x128xf32>
    %c0_3 = arith.constant 0 : index
    %3 = memref.load %arg3[%c0_3] : memref<12xf32, #tpu.memory_space<smem>>
    %4 = vector.broadcast %3 : f32 to vector<1x2x128xf32>
    %5 = arith.mulf %2, %4 : vector<1x2x128xf32>
    %6 = vector.extract_strided_slice %0 {offsets = [0, 1, 0, 0], sizes = [1, 1, 2, 128], strides = [1, 1, 1, 1]} : vector<1x4x2x128xf32> to vector<1x1x2x128xf32>
    %7 = vector.shape_cast %6 : vector<1x1x2x128xf32> to vector<1x2x128xf32>
    %c1 = arith.constant 1 : index
    %8 = memref.load %arg3[%c1] : memref<12xf32, #tpu.memory_space<smem>>
    %9 = vector.broadcast %8 : f32 to vector<1x2x128xf32>
    %10 = arith.mulf %7, %9 : vector<1x2x128xf32>
    %11 = arith.addf %5, %10 : vector<1x2x128xf32>
    %12 = vector.extract_strided_slice %0 {offsets = [0, 2, 0, 0], sizes = [1, 1, 2, 128], strides = [1, 1, 1, 1]} : vector<1x4x2x128xf32> to vector<1x1x2x128xf32>
    %13 = vector.shape_cast %12 : vector<1x1x2x128xf32> to vector<1x2x128xf32>
    %c2 = arith.constant 2 : index
    %14 = memref.load %arg3[%c2] : memref<12xf32, #tpu.memory_space<smem>>
    %15 = vector.broadcast %14 : f32 to vector<1x2x128xf32>
    %16 = arith.mulf %13, %15 : vector<1x2x128xf32>
    %17 = arith.addf %11, %16 : vector<1x2x128xf32>
    %18 = vector.extract_strided_slice %0 {offsets = [0, 3, 0, 0], sizes = [1, 1, 2, 128], strides = [1, 1, 1, 1]} : vector<1x4x2x128xf32> to vector<1x1x2x128xf32>
    %19 = vector.shape_cast %18 : vector<1x1x2x128xf32> to vector<1x2x128xf32>
    %c3 = arith.constant 3 : index
    %20 = memref.load %arg3[%c3] : memref<12xf32, #tpu.memory_space<smem>>
    %21 = vector.broadcast %20 : f32 to vector<1x2x128xf32>
    %22 = arith.mulf %19, %21 : vector<1x2x128xf32>
    %23 = arith.addf %17, %22 : vector<1x2x128xf32>
    %c0_4 = arith.constant 0 : index
    %24 = memref.load %arg4[%c0_4] : memref<3xf32, #tpu.memory_space<smem>>
    %25 = vector.broadcast %24 : f32 to vector<1x2x128xf32>
    %26 = arith.addf %23, %25 : vector<1x2x128xf32>
    %27 = vector.extract_strided_slice %0 {offsets = [0, 0, 0, 0], sizes = [1, 1, 2, 128], strides = [1, 1, 1, 1]} : vector<1x4x2x128xf32> to vector<1x1x2x128xf32>
    %28 = vector.shape_cast %27 : vector<1x1x2x128xf32> to vector<1x2x128xf32>
    %c4 = arith.constant 4 : index
    %29 = memref.load %arg3[%c4] : memref<12xf32, #tpu.memory_space<smem>>
    %30 = vector.broadcast %29 : f32 to vector<1x2x128xf32>
    %31 = arith.mulf %28, %30 : vector<1x2x128xf32>
    %32 = vector.extract_strided_slice %0 {offsets = [0, 1, 0, 0], sizes = [1, 1, 2, 128], strides = [1, 1, 1, 1]} : vector<1x4x2x128xf32> to vector<1x1x2x128xf32>
    %33 = vector.shape_cast %32 : vector<1x1x2x128xf32> to vector<1x2x128xf32>
    %c5 = arith.constant 5 : index
    %34 = memref.load %arg3[%c5] : memref<12xf32, #tpu.memory_space<smem>>
    %35 = vector.broadcast %34 : f32 to vector<1x2x128xf32>
    %36 = arith.mulf %33, %35 : vector<1x2x128xf32>
    %37 = arith.addf %31, %36 : vector<1x2x128xf32>
    %38 = vector.extract_strided_slice %0 {offsets = [0, 2, 0, 0], sizes = [1, 1, 2, 128], strides = [1, 1, 1, 1]} : vector<1x4x2x128xf32> to vector<1x1x2x128xf32>
    %39 = vector.shape_cast %38 : vector<1x1x2x128xf32> to vector<1x2x128xf32>
    %c6 = arith.constant 6 : index
    %40 = memref.load %arg3[%c6] : memref<12xf32, #tpu.memory_space<smem>>
    %41 = vector.broadcast %40 : f32 to vector<1x2x128xf32>
    %42 = arith.mulf %39, %41 : vector<1x2x128xf32>
    %43 = arith.addf %37, %42 : vector<1x2x128xf32>
    %44 = vector.extract_strided_slice %0 {offsets = [0, 3, 0, 0], sizes = [1, 1, 2, 128], strides = [1, 1, 1, 1]} : vector<1x4x2x128xf32> to vector<1x1x2x128xf32>
    %45 = vector.shape_cast %44 : vector<1x1x2x128xf32> to vector<1x2x128xf32>
    %c7 = arith.constant 7 : index
    %46 = memref.load %arg3[%c7] : memref<12xf32, #tpu.memory_space<smem>>
    %47 = vector.broadcast %46 : f32 to vector<1x2x128xf32>
    %48 = arith.mulf %45, %47 : vector<1x2x128xf32>
    %49 = arith.addf %43, %48 : vector<1x2x128xf32>
    %c1_5 = arith.constant 1 : index
    %50 = memref.load %arg4[%c1_5] : memref<3xf32, #tpu.memory_space<smem>>
    %51 = vector.broadcast %50 : f32 to vector<1x2x128xf32>
    %52 = arith.addf %49, %51 : vector<1x2x128xf32>
    %53 = vector.extract_strided_slice %0 {offsets = [0, 0, 0, 0], sizes = [1, 1, 2, 128], strides = [1, 1, 1, 1]} : vector<1x4x2x128xf32> to vector<1x1x2x128xf32>
    %54 = vector.shape_cast %53 : vector<1x1x2x128xf32> to vector<1x2x128xf32>
    %c8 = arith.constant 8 : index
    %55 = memref.load %arg3[%c8] : memref<12xf32, #tpu.memory_space<smem>>
    %56 = vector.broadcast %55 : f32 to vector<1x2x128xf32>
    %57 = arith.mulf %54, %56 : vector<1x2x128xf32>
    %58 = vector.extract_strided_slice %0 {offsets = [0, 1, 0, 0], sizes = [1, 1, 2, 128], strides = [1, 1, 1, 1]} : vector<1x4x2x128xf32> to vector<1x1x2x128xf32>
    %59 = vector.shape_cast %58 : vector<1x1x2x128xf32> to vector<1x2x128xf32>
    %c9 = arith.constant 9 : index
    %60 = memref.load %arg3[%c9] : memref<12xf32, #tpu.memory_space<smem>>
    %61 = vector.broadcast %60 : f32 to vector<1x2x128xf32>
    %62 = arith.mulf %59, %61 : vector<1x2x128xf32>
    %63 = arith.addf %57, %62 : vector<1x2x128xf32>
    %64 = vector.extract_strided_slice %0 {offsets = [0, 2, 0, 0], sizes = [1, 1, 2, 128], strides = [1, 1, 1, 1]} : vector<1x4x2x128xf32> to vector<1x1x2x128xf32>
    %65 = vector.shape_cast %64 : vector<1x1x2x128xf32> to vector<1x2x128xf32>
    %c10 = arith.constant 10 : index
    %66 = memref.load %arg3[%c10] : memref<12xf32, #tpu.memory_space<smem>>
    %67 = vector.broadcast %66 : f32 to vector<1x2x128xf32>
    %68 = arith.mulf %65, %67 : vector<1x2x128xf32>
    %69 = arith.addf %63, %68 : vector<1x2x128xf32>
    %70 = vector.extract_strided_slice %0 {offsets = [0, 3, 0, 0], sizes = [1, 1, 2, 128], strides = [1, 1, 1, 1]} : vector<1x4x2x128xf32> to vector<1x1x2x128xf32>
    %71 = vector.shape_cast %70 : vector<1x1x2x128xf32> to vector<1x2x128xf32>
    %c11 = arith.constant 11 : index
    %72 = memref.load %arg3[%c11] : memref<12xf32, #tpu.memory_space<smem>>
    %73 = vector.broadcast %72 : f32 to vector<1x2x128xf32>
    %74 = arith.mulf %71, %73 : vector<1x2x128xf32>
    %75 = arith.addf %69, %74 : vector<1x2x128xf32>
    %c2_6 = arith.constant 2 : index
    %76 = memref.load %arg4[%c2_6] : memref<3xf32, #tpu.memory_space<smem>>
    %77 = vector.broadcast %76 : f32 to vector<1x2x128xf32>
    %78 = arith.addf %75, %77 : vector<1x2x128xf32>
    %79 = vector.shape_cast %26 : vector<1x2x128xf32> to vector<1x1x2x128xf32>
    %80 = vector.shape_cast %52 : vector<1x2x128xf32> to vector<1x1x2x128xf32>
    %81 = vector.shape_cast %78 : vector<1x2x128xf32> to vector<1x1x2x128xf32>
    %82 = tpu.concatenate %79, %80, %81 in 1 : vector<1x1x2x128xf32>, vector<1x1x2x128xf32>, vector<1x1x2x128xf32> -> vector<1x3x2x128xf32>
    %c0_7 = arith.constant 0 : index
    %c0_8 = arith.constant 0 : index
    %c0_9 = arith.constant 0 : index
    %c0_10 = arith.constant 0 : index
    %83 = vector.load %arg5[%c0_7, %c0_8, %c0_9, %c0_10] : memref<1x3x2x128xf32, #tpu.memory_space<vmem>>, vector<1x3x2x128xf32>
    tpu.vector_store %arg5[%c0_7, %c0_8, %c0_9, %c0_10], %82 {strides = array<i32>} : memref<1x3x2x128xf32, #tpu.memory_space<vmem>>, vector<1x3x2x128xf32>,
    return
  }
  func.func @transform_0(%arg0: i32, %arg1: i32) -> (i32, i32, i32, i32) {
    %c0_i32 = arith.constant 0 : i32
    %c0_i32_0 = arith.constant 0 : i32
    %c0_i32_1 = arith.constant 0 : i32
    return %arg0, %c0_i32, %arg1, %c0_i32_0 : i32, i32, i32, i32
  }
  func.func @transform_1(%arg0: i32, %arg1: i32) -> i32 {
    %c0_i32 = arith.constant 0 : i32
    %c0_i32_0 = arith.constant 0 : i32
    return %c0_i32 : i32
  }
  func.func @transform_2(%arg0: i32, %arg1: i32) -> i32 {
    %c0_i32 = arith.constant 0 : i32
    %c0_i32_0 = arith.constant 0 : i32
    return %c0_i32 : i32
  }
  func.func @transform_3(%arg0: i32, %arg1: i32) -> (i32, i32, i32, i32) {
    %c0_i32 = arith.constant 0 : i32
    %c0_i32_0 = arith.constant 0 : i32
    %c0_i32_1 = arith.constant 0 : i32
    return %arg0, %c0_i32, %arg1, %c0_i32_0 : i32, i32, i32, i32
  }
}

</mosaic_0001>

<llo_original>
// kernel: tpu_custom_call.1
$region0: #{tpu_custom_call.1}
  #allocation0 [shape = 'u32[]', space=smem, size = 0x4, offset = 0x4, fixed_abs, tag = 'smem constant byte address 0x4 - core index']
  #allocation1 [shape = 'u32[144,128]{1,0:T(1,128)}', space=vmem, size = 0x12000, scoped, tag = 'internal scratch']
  %s0 = inlined_call_operand.hbm [shape: f32[2,4,2,128], index: 0, kind: input, shape index: {}]
  %s1 = inlined_call_operand.vmem [shape: f32[12], index: 1, kind: input, shape index: {}]
  %s2 = inlined_call_operand.vmem [shape: f32[3], index: 2, kind: input, shape index: {}]
  %s3 = inlined_call_operand.hbm [shape: f32[2,3,2,128], index: 3, kind: output, shape index: {}]
  %s4 = sld [smem:[#allocation0]]
  $region57: #{tpu_custom_call.1} parent=0
    _
  %s6 = ssub.s32 1, %s4
  %s7 = scalar_select 0, %s6, %s4
  $region1: #{tpu_custom_call.1} parent=0
    #allocation2 [shape = 'u8[8192]{0}', space=vmem, size = 0x2000, scoped, tag = 'input window, operand 0']
    #allocation3 [shape = 's32[2]{0}', space=sflag, size = 0x8, scoped, tag = 'scoped memory for tpu_custom_call.1']
    #allocation4 [shape = 's32[2]{0}', space=sflag, size = 0x8, scoped, tag = 'scoped memory for tpu_custom_call.1']
    #allocation5 [shape = 's32[2]{0}', space=sflag, size = 0x8, scoped, tag = 'scoped memory for tpu_custom_call.1']
    #allocation6 [shape = 'u8[512]{0}', space=smem, size = 0x200, scoped, tag = 'input window, operand 1, single buffered']
    #allocation7 [shape = 'u8[512]{0}', space=smem, size = 0x200, scoped, tag = 'input window, operand 2, single buffered']
    #allocation8 [shape = 's32[1]{0}', space=sflag, size = 0x4, scoped, tag = 'scoped memory for tpu_custom_call.1']
    #allocation9 [shape = 'u8[6144]{0}', space=vmem, size = 0x1800, scoped, tag = 'output window, operand 0']
    %8 = vsyncpa [#allocation3], 0
    %s9 = scalar_lea.sflag [#allocation3], 1
    %10 = vsyncpa %s9, 0
    %11 = vsyncpa [#allocation5], 0
    %12 = vsyncpa [#allocation8], 0
    %13 = vsyncpa [#allocation4], 0
    %s14 = scalar_lea.sflag [#allocation4], 1
    %15 = vsyncpa %s14, 0
    loop: start=0, step=1, limit=4
    $region2: #{tpu_custom_call.1} parent=1 // loop_pre_header
      _
    $region3: #{tpu_custom_call.1} parent=1 // loop_header
      %s17 = sphi 0, %s21
      %p18 = scmp.ge.s32.totalorder %s17, 4
      %s24 = sphi 0, %s36
      %s25 = sphi 0, %s32
      %s26 = sphi 0, %s24
      %s27 = sphi 0, %s25
      %s28 = sphi 0, %s26
      %s29 = sphi 0, %s27
      %s41 = sphi 0, %s43
      %s44 = sphi 0, %s41
      %s45 = sphi 0, %s44
      %s61 = sphi 0, %s45
      %s65 = sphi 0, %s65
      %s67 = sphi 0, %s65
      %s68 = sphi 0, %s67
      %s82 = sphi 0, %s68
      %s86 = sphi 0, %s86
      %s88 = sphi 0, %s86
      %s89 = sphi 0, %s88
      %s103 = sphi 0, %s89
      %s111 = sphi 0, %s113
      %s114 = sphi 0, %s111
      %s115 = sphi 0, %s114
      %s131 = sphi 0, %s115
    $region4: #{tpu_custom_call.1} parent=1 // loop_header_branch
      %20 = sbr.rel (%p18) target = $region8
    $region5: #{tpu_custom_call.1} parent=1 // loop_body
      %s22 = ssub.s32 %s17, 1
      %s23 = ssub.s32 %s17, 2
      %s30 = sadd.s32 1, %s25
      %p31 = scmp.ge.s32.totalorder %s30, 1
      %s32 = scalar_select %p31, 0, %s30
      %s33 = sadd.s32 1, %s24
      %s34 = scalar_select %p31, %s33, %s24
      %p35 = scmp.ge.s32.totalorder %s34, 2
      %s36 = scalar_select %p35, 0, %s34
      %s37 = ssub.s32 %s24, %s36
      %s38 = ssub.s32 %s25, %s32
      %s39 = sor.u32 %s37, %s38
      %p40 = scmp.eq.s32.totalorder %s39, 0
      %s42 = sadd.s32 %s41, 1
      %s43 = scalar_select %p40, %s41, %s42
      %p46 = pneg %p40
      %p47 = scmp.eq.s32.totalorder %s17, 1
      %p48 = por %p46, %p47
      %p49 = scmp.ne.s32.totalorder %s41, %s44
      %p50 = scmp.eq.s32.totalorder %s17, 0
      %p51 = por %p49, %p50
      %p52 = scmp.ne.s32.totalorder %s41, %s44
      %p53 = scmp.eq.s32.totalorder %s22, 1
      %p54 = por %p52, %p53
      %p55 = scmp.ne.s32.totalorder %s44, %s45
      %p56 = scmp.eq.s32.totalorder %s22, 0
      %p57 = por %p55, %p56
      %p58 = scmp.ne.s32.totalorder %s44, %s45
      %p59 = scmp.eq.s32.totalorder %s23, 1
      %p60 = por %p58, %p59
      %p62 = scmp.ne.s32.totalorder %s45, %s61
      %p63 = scmp.eq.s32.totalorder %s23, 0
      %p64 = por %p62, %p63
      %s66 = sadd.s32 %s65, 1
      %p69 = scmp.eq.s32.totalorder %s17, 1
      %p70 = scmp.ne.s32.totalorder %s65, %s67
      %p71 = scmp.eq.s32.totalorder %s17, 0
      %p72 = por %p70, %p71
      %p73 = scmp.ne.s32.totalorder %s65, %s67
      %p74 = scmp.eq.s32.totalorder %s22, 1
      %p75 = por %p73, %p74
      %p76 = scmp.ne.s32.totalorder %s67, %s68
      %p77 = scmp.eq.s32.totalorder %s22, 0
      %p78 = por %p76, %p77
      %p79 = scmp.ne.s32.totalorder %s67, %s68
      %p80 = scmp.eq.s32.totalorder %s23, 1
      %p81 = por %p79, %p80
      %p83 = scmp.ne.s32.totalorder %s68, %s82
      %p84 = scmp.eq.s32.totalorder %s23, 0
      %p85 = por %p83, %p84
      %s87 = sadd.s32 %s86, 1
      %p90 = scmp.eq.s32.totalorder %s17, 1
      %p91 = scmp.ne.s32.totalorder %s86, %s88
      %p92 = scmp.eq.s32.totalorder %s17, 0
      %p93 = por %p91, %p92
      %p94 = scmp.ne.s32.totalorder %s86, %s88
      %p95 = scmp.eq.s32.totalorder %s22, 1
      %p96 = por %p94, %p95
      %p97 = scmp.ne.s32.totalorder %s88, %s89
      %p98 = scmp.eq.s32.totalorder %s22, 0
      %p99 = por %p97, %p98
      %p100 = scmp.ne.s32.totalorder %s88, %s89
      %p101 = scmp.eq.s32.totalorder %s23, 1
      %p102 = por %p100, %p101
      %p104 = scmp.ne.s32.totalorder %s89, %s103
      %p105 = scmp.eq.s32.totalorder %s23, 0
      %p106 = por %p104, %p105
      %s107 = ssub.s32 %s24, %s36
      %s108 = ssub.s32 %s25, %s32
      %s109 = sor.u32 %s107, %s108
      %p110 = scmp.eq.s32.totalorder %s109, 0
      %s112 = sadd.s32 %s111, 1
      %s113 = scalar_select %p110, %s111, %s112
      %p116 = pneg %p110
      %p117 = scmp.eq.s32.totalorder %s17, 1
      %p118 = por %p116, %p117
      %p119 = scmp.ne.s32.totalorder %s111, %s114
      %p120 = scmp.eq.s32.totalorder %s17, 0
      %p121 = por %p119, %p120
      %p122 = scmp.ne.s32.totalorder %s111, %s114
      %p123 = scmp.eq.s32.totalorder %s22, 1
      %p124 = por %p122, %p123
      %p125 = scmp.ne.s32.totalorder %s114, %s115
      %p126 = scmp.eq.s32.totalorder %s22, 0
      %p127 = por %p125, %p126
      %p128 = scmp.ne.s32.totalorder %s114, %s115
      %p129 = scmp.eq.s32.totalorder %s23, 1
      %p130 = por %p128, %p129
      %p132 = scmp.ne.s32.totalorder %s115, %s131
      %p133 = scmp.eq.s32.totalorder %s23, 0
      %p134 = por %p132, %p133
      %p135 = scmp.le.s32.totalorder 1, %s17
      %p136 = scmp.lt.s32.totalorder %s17, 3
      %p137 = pnand %p135, %p136
      %p138 = pneg %p137
      // Predicated region
      $region9: #{tpu_custom_call.1} parent=5 // pred_check
        _
      $region10: #{tpu_custom_call.1} parent=5 // pred_check_branch
        %140 = sbr.rel (%p137) target = $region12
      $region11: #{tpu_custom_call.1} parent=5 // pred_region
        %s141 = ssub.s32 %s17, 1
        // Predicated region
        $region13: #{tpu_custom_call.1} parent=11 // pred_check
          %p142 = pneg %p78
        $region14: #{tpu_custom_call.1} parent=11 // pred_check_branch
          %144 = sbr.rel (%p142) target = $region16
        $region15: #{tpu_custom_call.1} parent=11 // pred_region
          %s146 = ssub.s32 16, 16
          %147 = vsyncadd [#allocation5], %s146
          %s149 = sshll.u32 %s1, 4
          %s150 = int_to_ptr.vmem [resolvable:$true] %s149
          %152 = dma.vmem_to_smem %s150, 16, [#allocation6], [#allocation5]
        $region16: #{tpu_custom_call.1} parent=11 // pred_fallthru
          _
        // Predicated region
        $region17: #{tpu_custom_call.1} parent=11 // pred_check
          %p153 = pneg %p99
        $region18: #{tpu_custom_call.1} parent=11 // pred_check_branch
          %155 = sbr.rel (%p153) target = $region20
        $region19: #{tpu_custom_call.1} parent=11 // pred_region
          %s157 = ssub.s32 16, 16
          %158 = vsyncadd [#allocation8], %s157
          %s160 = sshll.u32 %s2, 4
          %s161 = int_to_ptr.vmem [resolvable:$true] %s160
          %163 = dma.vmem_to_smem %s161, 16, [#allocation7], [#allocation8]
        $region20: #{tpu_custom_call.1} parent=11 // pred_fallthru
          _
      $region12: #{tpu_custom_call.1} parent=5 // pred_fallthru
        _
      %p164 = scmp.lt.s32.totalorder %s17, 2
      // Predicated region
      $region21: #{tpu_custom_call.1} parent=5 // pred_check
        %p165 = pneg %p164
      $region22: #{tpu_custom_call.1} parent=5 // pred_check_branch
        %167 = sbr.rel (%p165) target = $region24
      $region23: #{tpu_custom_call.1} parent=5 // pred_region
        // Predicated region
        $region25: #{tpu_custom_call.1} parent=23 // pred_check
          %p168 = pneg %p51
        $region26: #{tpu_custom_call.1} parent=23 // pred_check_branch
          %170 = sbr.rel (%p168) target = $region28
        $region27: #{tpu_custom_call.1} parent=23 // pred_region
          %s171 = sand.u32 %s41, 1
          %s172 = scalar_lea.sflag [#allocation3], %s171
          %s173 = sand.u32 %s41, 1
          %s174 = smul.addr %s173, 8
          %s175 = scalar_lea.vmem [#allocation2], %s174
          %s177 = ssub.s32 128, 128
          %178 = vsyncadd %s172, %s177
          %s179 = smul.addr %s24, 4
          %s180 = sadd.s32 %s25, %s179
          %s181 = smul.addr %s180, 32
          %s182 = scalar_lea.hbm %s0, %s181
          %s183 = sshll.u32 %s175, 4
          %s184 = int_to_ptr.vmem [resolvable:$true] %s183
          %189 = dma.hbm_to_vmem [thread:$0]  %s182, 128, %s184, %s172, 32, 32, 2
        $region28: #{tpu_custom_call.1} parent=23 // pred_fallthru
          _
      $region24: #{tpu_custom_call.1} parent=5 // pred_fallthru
        _
      %p190 = scmp.le.s32.totalorder 1, %s17
      %p191 = scmp.lt.s32.totalorder %s17, 3
      %p192 = pnand %p190, %p191
      %p193 = pneg %p192
      // Predicated region
      $region29: #{tpu_custom_call.1} parent=5 // pred_check
        _
      $region30: #{tpu_custom_call.1} parent=5 // pred_check_branch
        %195 = sbr.rel (%p192) target = $region32
      $region31: #{tpu_custom_call.1} parent=5 // pred_region
        %s196 = ssub.s32 %s17, 1
        %s197 = sand.u32 %s44, 1
        %s198 = scalar_lea.sflag [#allocation3], %s197
        %s199 = sand.u32 %s44, 1
        %s200 = smul.addr %s199, 8
        %s201 = scalar_lea.vmem [#allocation2], %s200
        // Predicated region
        $region33: #{tpu_custom_call.1} parent=31 // pred_check
          %p202 = pneg %p57
        $region34: #{tpu_custom_call.1} parent=31 // pred_check_branch
          %204 = sbr.rel (%p202) target = $region36
        $region35: #{tpu_custom_call.1} parent=31 // pred_region
          %205 = dma.done %s198, 128
        $region36: #{tpu_custom_call.1} parent=31 // pred_fallthru
          _
        // Predicated region
        $region37: #{tpu_custom_call.1} parent=31 // pred_check
          %p206 = pneg %p78
        $region38: #{tpu_custom_call.1} parent=31 // pred_check_branch
          %208 = sbr.rel (%p206) target = $region40
        $region39: #{tpu_custom_call.1} parent=31 // pred_region
          %209 = dma.done [#allocation5], 16
        $region40: #{tpu_custom_call.1} parent=31 // pred_fallthru
          _
        // Predicated region
        $region41: #{tpu_custom_call.1} parent=31 // pred_check
          %p210 = pneg %p99
        $region42: #{tpu_custom_call.1} parent=31 // pred_check_branch
          %212 = sbr.rel (%p210) target = $region44
        $region43: #{tpu_custom_call.1} parent=31 // pred_region
          %213 = dma.done [#allocation8], 16
        $region44: #{tpu_custom_call.1} parent=31 // pred_fallthru
          _
        %214 = sfence
        %s215 = sand.u32 %s44, 1
        %s216 = scalar_lea.sflag [#allocation3], %s215
        %s217 = sand.u32 %s44, 1
        %s218 = smul.addr %s217, 8
        %s219 = scalar_lea.vmem [#allocation2], %s218
        %p220 = pneg %p57
        %p221 = pneg %p54
        %p222 = pneg %p78
        %p223 = pneg %p75
        %p224 = pneg %p99
        %p225 = pneg %p96
        %p226 = pneg %p127
        %p227 = pneg %p124
        %s228 = sand.u32 %s114, 1
        %s229 = scalar_lea.sflag [#allocation4], %s228
        %s230 = sand.u32 %s114, 1
        %s231 = smul.addr %s230, 6
        %s232 = scalar_lea.vmem [#allocation9], %s231
        %v233 = vld [vmem:[%s201] sm:$0x3]
        %v234 = vld [vmem:[%s201 + $0x2] sm:$0x3]
        %v235 = vld [vmem:[%s201 + $0x4] sm:$0x3]
        %v236 = vld [vmem:[%s201 + $0x6] sm:$0x3]
        %s237 = sld [smem:[#allocation6]]
        %v238 = vstv %s237
        %v239 = vmul.f32 %v233, %v238
        %s240 = sld [smem:[#allocation6 + $0x1]]
        %v241 = vstv %s240
        %v242 = vmul.f32 %v234, %v241
        %v243 = vadd.f32 %v239, %v242
        %s244 = sld [smem:[#allocation6 + $0x2]]
        %v245 = vstv %s244
        %v246 = vmul.f32 %v235, %v245
        %v247 = vadd.f32 %v243, %v246
        %s248 = sld [smem:[#allocation6 + $0x3]]
        %v249 = vstv %s248
        %v250 = vmul.f32 %v236, %v249
        %v251 = vadd.f32 %v247, %v250
        %s252 = sld [smem:[#allocation7]]
        %v253 = vstv %s252
        %v254 = vadd.f32 %v251, %v253
        %s255 = sld [smem:[#allocation6 + $0x4]]
        %v256 = vstv %s255
        %v257 = vmul.f32 %v233, %v256
        %s258 = sld [smem:[#allocation6 + $0x5]]
        %v259 = vstv %s258
        %v260 = vmul.f32 %v234, %v259
        %v261 = vadd.f32 %v257, %v260
        %s262 = sld [smem:[#allocation6 + $0x6]]
        %v263 = vstv %s262
        %v264 = vmul.f32 %v235, %v263
        %v265 = vadd.f32 %v261, %v264
        %s266 = sld [smem:[#allocation6 + $0x7]]
        %v267 = vstv %s266
        %v268 = vmul.f32 %v236, %v267
        %v269 = vadd.f32 %v265, %v268
        %s270 = sld [smem:[#allocation7 + $0x1]]
        %v271 = vstv %s270
        %v272 = vadd.f32 %v269, %v271
        %s273 = sld [smem:[#allocation6 + $0x8]]
        %v274 = vstv %s273
        %v275 = vmul.f32 %v233, %v274
        %s276 = sld [smem:[#allocation6 + $0x9]]
        %v277 = vstv %s276
        %v278 = vmul.f32 %v234, %v277
        %v279 = vadd.f32 %v275, %v278
        %s280 = sld [smem:[#allocation6 + $0xa]]
        %v281 = vstv %s280
        %v282 = vmul.f32 %v235, %v281
        %v283 = vadd.f32 %v279, %v282
        %s284 = sld [smem:[#allocation6 + $0xb]]
        %v285 = vstv %s284
        %v286 = vmul.f32 %v236, %v285
        %v287 = vadd.f32 %v283, %v286
        %s288 = sld [smem:[#allocation7 + $0x2]]
        %v289 = vstv %s288
        %v290 = vadd.f32 %v287, %v289
        %291 = vst [vmem:[%s232] sm:$0x3] %v254
        %292 = vst [vmem:[%s232 + $0x2] sm:$0x3] %v272
        %293 = vst [vmem:[%s232 + $0x4] sm:$0x3] %v290
        %s294 = sand.u32 %s114, 1
        %s295 = scalar_lea.sflag [#allocation4], %s294
        %s296 = sand.u32 %s114, 1
        %s297 = smul.addr %s296, 6
        %s298 = scalar_lea.vmem [#allocation9], %s297
        // Predicated region
        $region45: #{tpu_custom_call.1} parent=31 // pred_check
          %p299 = pneg %p124
        $region46: #{tpu_custom_call.1} parent=31 // pred_check_branch
          %301 = sbr.rel (%p299) target = $region48
        $region47: #{tpu_custom_call.1} parent=31 // pred_region
          %s303 = ssub.s32 96, 96
          %304 = vsyncadd %s295, %s303
          %s305 = smul.addr %s26, 3
          %s306 = sadd.s32 %s27, %s305
          %s307 = smul.addr %s306, 32
          %s308 = scalar_lea.hbm %s3, %s307
          %s309 = sshll.u32 %s298, 4
          %s310 = int_to_ptr.vmem [resolvable:$true] %s309
          %315 = dma.vmem_to_hbm [thread:$0]  %s310, 96, %s308, %s295, 32, 32, 2
        $region48: #{tpu_custom_call.1} parent=31 // pred_fallthru
          _
      $region32: #{tpu_custom_call.1} parent=5 // pred_fallthru
        _
      %p316 = scmp.le.s32.totalorder 2, %s17
      // Predicated region
      $region49: #{tpu_custom_call.1} parent=5 // pred_check
        %p317 = pneg %p316
      $region50: #{tpu_custom_call.1} parent=5 // pred_check_branch
        %319 = sbr.rel (%p317) target = $region52
      $region51: #{tpu_custom_call.1} parent=5 // pred_region
        %s320 = ssub.s32 %s17, 2
        // Predicated region
        $region53: #{tpu_custom_call.1} parent=51 // pred_check
          %p321 = pneg %p130
        $region54: #{tpu_custom_call.1} parent=51 // pred_check_branch
          %323 = sbr.rel (%p321) target = $region56
        $region55: #{tpu_custom_call.1} parent=51 // pred_region
          %s324 = sand.u32 %s115, 1
          %s325 = scalar_lea.sflag [#allocation4], %s324
          %s326 = sand.u32 %s115, 1
          %s327 = smul.addr %s326, 6
          %s328 = scalar_lea.vmem [#allocation9], %s327
          %329 = dma.done %s325, 96
        $region56: #{tpu_custom_call.1} parent=51 // pred_fallthru
          _
      $region52: #{tpu_custom_call.1} parent=5 // pred_fallthru
        _
    $region6: #{tpu_custom_call.1} parent=1 // loop_footer
      %s21 = sadd.s32 1, %s17
    $region7: #{tpu_custom_call.1} parent=1 // loop_footer_branch
      %16 = sbr.rel target = $region3
    $region8: #{tpu_custom_call.1} parent=1 // loop_exit
      _
    %330 = vsyncpa [#allocation3], 1
    %s331 = scalar_lea.sflag [#allocation3], 1
    %332 = vsyncpa %s331, 1
    %333 = vsyncpa [#allocation4], 1
    %s334 = scalar_lea.sflag [#allocation4], 1
    %335 = vsyncpa %s334, 1
    %336 = vsyncpa [#allocation5], 1
    %s337 = scalar_lea.sflag [#allocation5], 1
    %338 = vsyncpa %s337, 1
    %339 = vsyncpa [#allocation8], 1

</llo_original>
